<compile_context>
chip_gen: v5e
topology: v5e:2x2
jax: 0.10.0
libtpu: 0.0.40
codegen_flags: <defaults>
</compile_context>

<pallas_src>
import functools
import math

import jax
import jax.numpy as jnp
from jax.experimental import pallas as pl
from jax.experimental.pallas import tpu as pltpu

_LANE = 128
_SUB = 8


def _round_up(x, m):
    return (x + m - 1) // m * m


def _cdiv(a, b):
    return -(-a // b)


def _dtype_bytes(dt):
    return jnp.dtype(dt).itemsize


def _vmem_budget():
    """Per-generation VMEM budget (bytes), leaving headroom for Mosaic scratch."""
    cap = 64 * 1024 * 1024  # conservative default (covers v7x's 64 MiB per TC)
    try:
        info = pltpu.get_tpu_info()
        cap = int(getattr(info, "vmem_capacity_bytes", cap))
    except Exception:
        pass
    return max(32 * 1024 * 1024, (cap * 3) // 4)


def _pick_tile(dim, max_tile, align, min_tiles=1):
    """Balanced tile: roughly dim/ceil(dim/max_tile), aligned, never > dim_a."""
    dim_a = _round_up(max(dim, 1), align)
    tiles = max(min_tiles, _cdiv(dim_a, max_tile))
    return min(_round_up(_cdiv(dim_a, tiles), align), dim_a)


# ------------------------------ Pallas kernels ------------------------------
def _two_linear_kernel(x_ref, w1_ref, b1_ref, w2_ref, b2_ref, *refs,
                       tn, w2_resident, want_feats):
    # grid = (M tiles [parallel], OUT tiles [arbitrary, innermost]).
    # fc1 runs once per M tile (n == 0); result lives in VMEM scratch and is
    # reused for every OUT tile of fc2.  feats (if any) has a constant-along-n
    # output block, so it is written back only when the M tile changes.
    if want_feats:
        feats_ref, preds_ref, h_ref = refs
    else:
        preds_ref, h_ref = refs

    n = pl.program_id(1)

    @pl.when(n == 0)
    def _():
        h = jnp.dot(x_ref[...], w1_ref[...],
                    preferred_element_type=jnp.float32) + b1_ref[...]
        if want_feats:
            feats_ref[...] = h.astype(feats_ref.dtype)
        h_ref[...] = h.astype(h_ref.dtype)

    if w2_resident:
        col = pl.multiple_of(n * tn, tn)
        w2_blk = w2_ref[:, pl.ds(col, tn)]
        b2_blk = b2_ref[:, pl.ds(col, tn)]
    else:
        w2_blk = w2_ref[...]
        b2_blk = b2_ref[...]

    preds_ref[...] = (jnp.dot(h_ref[...], w2_blk,
                              preferred_element_type=jnp.float32)
                      + b2_blk).astype(preds_ref.dtype)


def _single_linear_kernel(x_ref, w_ref, b_ref, out_ref, *, tn, w_resident):
    if w_resident:
        n = pl.program_id(1)
        col = pl.multiple_of(n * tn, tn)
        w_blk = w_ref[:, pl.ds(col, tn)]
        b_blk = b_ref[:, pl.ds(col, tn)]
    else:
        w_blk = w_ref[...]
        b_blk = b_ref[...]
    out_ref[...] = (jnp.dot(x_ref[...], w_blk,
                            preferred_element_type=jnp.float32)
                    + b_blk).astype(out_ref.dtype)


# ------------------------------ kernel drivers ------------------------------
def _shrink_to_fit(est_fn, TM, TN, budget):
    while est_fn(TM, TN) > budget and (TM > _SUB or TN > _LANE):
        if TN >= TM and TN > _LANE:
            TN = max(_LANE, _round_up(TN // 2, _LANE))
        elif TM > _SUB:
            TM = max(_SUB, _round_up(TM // 2, _SUB))
        else:
            TN = max(_LANE, _round_up(TN // 2, _LANE))
    return TM, TN


def _run_two_linear(x2d, w1_t, b1_row, w2_t, b2_row, *,
                    want_feats, out_dtype, compute_dtype):
    M, C = x2d.shape
    MID = w1_t.shape[1]
    OUT = w2_t.shape[1]

    in_b = _dtype_bytes(compute_dtype)
    out_b = _dtype_bytes(out_dtype)
    budget = _vmem_budget()

    C_p = _round_up(C, _LANE)
    MID_p = _round_up(MID, _LANE)

    # fc2 weight fully VMEM-resident (single HBM fetch) when comfortably small.
    w2_resident = 2 * MID_p * _round_up(OUT, _LANE) * in_b <= budget // 3

    # Balanced tiles; >=2 M tiles when possible so both v7x TensorCores work.
    TM = _pick_tile(M, 1024, _SUB, min_tiles=2 if M >= 256 else 1)
    TN = _pick_tile(OUT, 1024, _LANE)

    def est(tm, tn):
        e = 2 * tm * C_p * in_b                       # x (double-buffered)
        e += 2 * C_p * MID_p * in_b                   # w1
        e += 2 * _SUB * MID_p * 4                     # b1
        if w2_resident:
            out_pp = _cdiv(OUT, tn) * tn
            e += 2 * MID_p * out_pp * in_b + 2 * _SUB * out_pp * 4
        else:
            e += 2 * MID_p * tn * in_b + 2 * _SUB * tn * 4
        e += 2 * tm * tn * out_b                      # preds
        if want_feats:
            e += 2 * tm * MID_p * out_b               # feats
        e += tm * MID_p * in_b                        # h scratch
        return e

    TM, TN = _shrink_to_fit(est, TM, TN, budget)
    grid = (_cdiv(M, TM), _cdiv(OUT, TN))

    xc = x2d.astype(compute_dtype)
    w1c = w1_t.astype(compute_dtype)
    b1c = b1_row.astype(jnp.float32)

    if w2_resident:
        out_pp = grid[1] * TN
        w2c, b2c = w2_t, b2_row
        if out_pp != OUT:       # tiny weight pad so in-kernel pl.ds never clamps
            w2c = jnp.pad(w2c, ((0, 0), (0, out_pp - OUT)))
            b2c = jnp.pad(b2c, ((0, 0), (0, out_pp - OUT)))
        w2c = w2c.astype(compute_dtype)
        b2c = b2c.astype(jnp.float32)
        w2_spec = pl.BlockSpec((MID, out_pp), lambda m, n: (0, 0))
        b2_spec = pl.BlockSpec((1, out_pp), lambda m, n: (0, 0))
    else:
        w2c = w2_t.astype(compute_dtype)
        b2c = b2_row.astype(jnp.float32)
        w2_spec = pl.BlockSpec((MID, TN), lambda m, n: (0, n))
        b2_spec = pl.BlockSpec((1, TN), lambda m, n: (0, n))

    in_specs = [
        pl.BlockSpec((TM, C), lambda m, n: (m, 0)),     # x M-tile
        pl.BlockSpec((C, MID), lambda m, n: (0, 0)),    # w1 resident
        pl.BlockSpec((1, MID), lambda m, n: (0, 0)),    # b1 resident
        w2_spec, b2_spec,
    ]
    preds_spec = pl.BlockSpec((TM, TN), lambda m, n: (m, n))
    scratch = [pltpu.VMEM((TM, MID), compute_dtype)]
    cparams = pltpu.CompilerParams(
        dimension_semantics=("parallel", "arbitrary"),
        vmem_limit_bytes=budget,
    )
    kern = functools.partial(_two_linear_kernel, tn=TN,
                             w2_resident=w2_resident, want_feats=want_feats)

    if want_feats:
        feats_spec = pl.BlockSpec((TM, MID), lambda m, n: (m, 0))
        feats, preds = pl.pallas_call(
            kern,
            out_shape=(jax.ShapeDtypeStruct((M, MID), out_dtype),
                       jax.ShapeDtypeStruct((M, OUT), out_dtype)),
            grid_spec=pltpu.PrefetchScalarGridSpec(
                num_scalar_prefetch=0, grid=grid,
                in_specs=in_specs, out_specs=(feats_spec, preds_spec),
                scratch_shapes=scratch),
            compiler_params=cparams,
        )(xc, w1c, b1c, w2c, b2c)
        return feats, preds

    preds = pl.pallas_call(
        kern,
        out_shape=jax.ShapeDtypeStruct((M, OUT), out_dtype),
        grid_spec=pltpu.PrefetchScalarGridSpec(
            num_scalar_prefetch=0, grid=grid,
            in_specs=in_specs, out_specs=preds_spec,
            scratch_shapes=scratch),
        compiler_params=cparams,
    )(xc, w1c, b1c, w2c, b2c)
    return None, preds


def _run_single_linear(x2d, w_t, b_row, *, out_dtype, compute_dtype):
    M, C = x2d.shape
    OUT = w_t.shape[1]

    in_b = _dtype_bytes(compute_dtype)
    out_b = _dtype_bytes(out_dtype)
    budget = _vmem_budget()

    C_p = _round_up(C, _LANE)
    w_resident = 2 * C_p * _round_up(OUT, _LANE) * in_b <= budget // 3

    TM = _pick_tile(M, 1024, _SUB, min_tiles=2 if M >= 256 else 1)
    TN = _pick_tile(OUT, 1024, _LANE)

    def est(tm, tn):
        e = 2 * tm * C_p * in_b
        if w_resident:
            out_pp = _cdiv(OUT, tn) * tn
            e += 2 * C_p * out_pp * in_b + 2 * _SUB * out_pp * 4
        else:
            e += 2 * C_p * tn * in_b + 2 * _SUB * tn * 4
        e += 2 * tm * tn * out_b
        return e

    TM, TN = _shrink_to_fit(est, TM, TN, budget)
    grid = (_cdiv(M, TM), _cdiv(OUT, TN))

    xc = x2d.astype(compute_dtype)
    if w_resident:
        out_pp = grid[1] * TN
        wc, bc = w_t, b_row
        if out_pp != OUT:
            wc = jnp.pad(wc, ((0, 0), (0, out_pp - OUT)))
            bc = jnp.pad(bc, ((0, 0), (0, out_pp - OUT)))
        wc = wc.astype(compute_dtype)
        bc = bc.astype(jnp.float32)
        w_spec = pl.BlockSpec((C, out_pp), lambda m, n: (0, 0))
        b_spec = pl.BlockSpec((1, out_pp), lambda m, n: (0, 0))
    else:
        wc = w_t.astype(compute_dtype)
        bc = b_row.astype(jnp.float32)
        w_spec = pl.BlockSpec((C, TN), lambda m, n: (0, n))
        b_spec = pl.BlockSpec((1, TN), lambda m, n: (0, n))

    kern = functools.partial(_single_linear_kernel, tn=TN, w_resident=w_resident)
    preds = pl.pallas_call(
        kern,
        out_shape=jax.ShapeDtypeStruct((M, OUT), out_dtype),
        grid_spec=pltpu.PrefetchScalarGridSpec(
            num_scalar_prefetch=0, grid=grid,
            in_specs=[pl.BlockSpec((TM, C), lambda m, n: (m, 0)), w_spec, b_spec],
            out_specs=pl.BlockSpec((TM, TN), lambda m, n: (m, n))),
        compiler_params=pltpu.CompilerParams(
            dimension_semantics=("parallel", "parallel"),
            vmem_limit_bytes=budget),
    )(xc, wc, bc)
    return preds


# ------------------------------ module wrapper ------------------------------
class SvtrHeadPallas:
    """JAX/Pallas equivalent of svtrHead (Im2Seq + CTCHead).

    compute_dtype / out_dtype default to float32 (exact PyTorch semantics);
    set both to bfloat16 for the HBM/MXU-optimal configuration.
    """

    def __init__(self, in_channels, out_channels, mid_channels, return_feats,
                 key=jax.random.PRNGKey(0),
                 compute_dtype=jnp.float32, out_dtype=jnp.float32):
        self.in_channels = in_channels
        self.out_channels = out_channels
        self.mid_channels = mid_channels
        self.return_feats = return_feats
        self.compute_dtype = compute_dtype
        self.out_dtype = out_dtype

        k1, k2, k3, k4 = jax.random.split(key, 4)
        if mid_channels is None:
            bound = 1.0 / math.sqrt(in_channels)
            self.w1 = jax.random.uniform(k1, (out_channels, in_channels),
                                         jnp.float32, -bound, bound)
            self.b1 = jax.random.uniform(k2, (out_channels,),
                                         jnp.float32, -bound, bound)
            self.w2 = None
            self.b2 = None
        else:
            bound1 = 1.0 / math.sqrt(in_channels)
            self.w1 = jax.random.uniform(k1, (mid_channels, in_channels),
                                         jnp.float32, -bound1, bound1)
            self.b1 = jax.random.uniform(k2, (mid_channels,),
                                         jnp.float32, -bound1, bound1)
            bound2 = 1.0 / math.sqrt(mid_channels)
            self.w2 = jax.random.uniform(k3, (out_channels, mid_channels),
                                         jnp.float32, -bound2, bound2)
            self.b2 = jax.random.uniform(k4, (out_channels,),
                                         jnp.float32, -bound2, bound2)

    def __call__(self, x):
        B, C, H, W = x.shape
        assert H == 1, "Im2Seq requires H == 1"
        assert C == self.in_channels
        # Im2Seq: squeeze H, (B, C, W) -> (B, W, C)
        # TODO(synk): fuse this transpose into the matmul kernel (read x in its
        # native (B, C, W) layout and contract over C); it is a minor extra HBM
        # pass compared to the preds writeback for dictionary-sized OUT.
        seq = jnp.transpose(x[:, :, 0, :], (0, 2, 1))     # (B, W, C)
        x2d = seq.reshape(B * W, C)                        # (B*W, C)

        if self.mid_channels is None:
            preds2d = _run_single_linear(
                x2d, self.w1.T, self.b1[None, :],
                out_dtype=self.out_dtype, compute_dtype=self.compute_dtype)
            preds = preds2d.reshape(B, W, self.out_channels)
            if self.return_feats:
                # CTCHead with mid=None: feats is the (unchanged) neck output.
                return seq, preds
            return preds

        feats2d, preds2d = _run_two_linear(
            x2d, self.w1.T, self.b1[None, :], self.w2.T, self.b2[None, :],
            want_feats=self.return_feats,
            out_dtype=self.out_dtype, compute_dtype=self.compute_dtype)
        preds = preds2d.reshape(B, W, self.out_channels)
        if self.return_feats:
            feats = feats2d.reshape(B, W, self.mid_channels)
            return feats, preds
        return preds


# --------------------------- reference (pure JAX) ---------------------------
def _reference(head, x):
    B, C, H, W = x.shape
    seq = jnp.transpose(x[:, :, 0, :], (0, 2, 1))
    if head.mid_channels is None:
        preds = seq @ head.w1.T + head.b1
        feats = seq
    else:
        feats = seq @ head.w1.T + head.b1
        preds = feats @ head.w2.T + head.b2
    return (feats, preds) if head.return_feats else preds


if __name__ == "__main__":
    key = jax.random.PRNGKey(0)
    kx, kp, kp2, kp3 = jax.random.split(key, 4)

    B, C, H, W = 2, 32, 1, 8          # small shapes consistent with Im2Seq (H==1)
    mid_channels = 48
    out_channels = 64

    x = jax.random.normal(kx, (B, C, H, W), dtype=jnp.float32)

    # --- two-linear path (mid_channels set, return_feats=True), exact f32 ---
    head = SvtrHeadPallas(in_channels=C, out_channels=out_channels,
                          mid_channels=mid_channels, return_feats=True, key=kp)
    feats, preds = head(x)
    jax.block_until_ready(preds)
    jax.block_until_ready(feats)

    ref_feats, ref_preds = _reference(head, x)
    assert feats.shape == (B, W, mid_channels)
    assert preds.shape == (B, W, out_channels)
    assert jnp.allclose(feats, ref_feats, atol=1e-5, rtol=1e-5)
    assert jnp.allclose(preds, ref_preds, atol=1e-5, rtol=1e-5)

    # --- single-linear path (mid_channels=None, return_feats=False) ---
    head1 = SvtrHeadPallas(in_channels=C, out_channels=out_channels,
                           mid_channels=None, return_feats=False, key=kp2)
    preds1 = head1(x)
    jax.block_until_ready(preds1)
    ref_preds1 = _reference(head1, x)
    assert preds1.shape == (B, W, out_channels)
    assert jnp.allclose(preds1, ref_preds1, atol=1e-5, rtol=1e-5)

    # --- bf16 fast path (perf config: bf16 operands/output, f32 accumulate) ---
    head_bf = SvtrHeadPallas(in_channels=C, out_channels=out_channels,
                             mid_channels=mid_channels, return_feats=False,
                             key=kp3, compute_dtype=jnp.bfloat16,
                             out_dtype=jnp.bfloat16)
    preds_bf = head_bf(x)
    jax.block_until_ready(preds_bf)
    ref_bf = _reference(head_bf, x)
    assert preds_bf.dtype == jnp.bfloat16
    assert jnp.allclose(preds_bf.astype(jnp.float32), ref_bf,
                        atol=5e-2, rtol=5e-2)

    print("KERNEL_OK")
</pallas_src>

<mosaic_0001>
module attributes {stable_mosaic.version = 11 : i64} {
  func.func @_two_linear_kernel(%arg0: i32, %arg1: i32, %arg2: memref<16x32xf32, #tpu.memory_space<vmem>>, %arg3: memref<32x48xf32, #tpu.memory_space<vmem>>, %arg4: memref<1x48xf32, #tpu.memory_space<vmem>>, %arg5: memref<48x128xf32, #tpu.memory_space<vmem>>, %arg6: memref<1x128xf32, #tpu.memory_space<vmem>>, %arg7: memref<16x48xf32, #tpu.memory_space<vmem>>, %arg8: memref<16x128xf32, #tpu.memory_space<vmem>>, %arg9: memref<16x48xf32, #tpu.memory_space<vmem>>) attributes {dimension_semantics = [#tpu.dimension_semantics<parallel>, #tpu.dimension_semantics<arbitrary>], iteration_bounds = array<i64: 1, 1>, scalar_prefetch = 0 : i64, scratch_operands = 1 : i64, tpu.core_type = #tpu.core_type<tc>, window_params = [{transform_indices = @transform_0, window_bounds = array<i64: 16, 32>}, {pipeline_mode = #tpu.pipeline_mode<synchronous>, transform_indices = @transform_1, window_bounds = array<i64: 32, 48>}, {pipeline_mode = #tpu.pipeline_mode<synchronous>, transform_indices = @transform_2, window_bounds = array<i64: 1, 48>}, {pipeline_mode = #tpu.pipeline_mode<synchronous>, transform_indices = @transform_3, window_bounds = array<i64: 48, 128>}, {pipeline_mode = #tpu.pipeline_mode<synchronous>, transform_indices = @transform_4, window_bounds = array<i64: 1, 128>}, {transform_indices = @transform_5, window_bounds = array<i64: 16, 48>}, {transform_indices = @transform_6, window_bounds = array<i64: 16, 128>}]} {
    %c0_i32 = arith.constant 0 : i32
    %0 = arith.cmpi eq, %arg1, %c0_i32 : i32
    %1 = arith.extui %0 : i1 to i32
    %c0_i32_0 = arith.constant 0 : i32
    %2 = arith.cmpi ne, %1, %c0_i32_0 : i32
    scf.if %2 {
      %c0_6 = arith.constant 0 : index
      %c0_7 = arith.constant 0 : index
      %14 = vector.load %arg2[%c0_6, %c0_7] : memref<16x32xf32, #tpu.memory_space<vmem>>, vector<16x32xf32>
      %c0_8 = arith.constant 0 : index
      %c0_9 = arith.constant 0 : index
      %15 = vector.load %arg3[%c0_8, %c0_9] : memref<32x48xf32, #tpu.memory_space<vmem>>, vector<32x48xf32>
      %cst_10 = arith.constant dense<0.000000e+00> : vector<16x48xf32>
      %16 = tpu.matmul %14, %15, %cst_10 {dimension_numbers = #tpu.dot_dimension_numbers<[1], [0], [0], [1], [0, 0, 1, 1], [], []>} : vector<16x32xf32>, vector<32x48xf32>, vector<16x48xf32> -> vector<16x48xf32>
      %c0_11 = arith.constant 0 : index
      %c0_12 = arith.constant 0 : index
      %17 = vector.load %arg4[%c0_11, %c0_12] : memref<1x48xf32, #tpu.memory_space<vmem>>, vector<1x48xf32>
      %18 = vector.broadcast %17 : vector<1x48xf32> to vector<16x48xf32>
      %19 = arith.addf %16, %18 : vector<16x48xf32>
      %c0_13 = arith.constant 0 : index
      %c0_14 = arith.constant 0 : index
      %20 = vector.load %arg7[%c0_13, %c0_14] : memref<16x48xf32, #tpu.memory_space<vmem>>, vector<16x48xf32>
      tpu.vector_store %arg7[%c0_13, %c0_14], %19 {strides = array<i32>} : memref<16x48xf32, #tpu.memory_space<vmem>>, vector<16x48xf32>,
      %c0_15 = arith.constant 0 : index
      %c0_16 = arith.constant 0 : index
      %21 = vector.load %arg9[%c0_15, %c0_16] : memref<16x48xf32, #tpu.memory_space<vmem>>, vector<16x48xf32>
      tpu.vector_store %arg9[%c0_15, %c0_16], %19 {strides = array<i32>} : memref<16x48xf32, #tpu.memory_space<vmem>>, vector<16x48xf32>,
    } else {
    }
    %c128_i32 = arith.constant 128 : i32
    %3 = arith.muli %arg1, %c128_i32 : i32
    %4 = tpu.assume_multiple %3, 128 : i32
    %c0 = arith.constant 0 : index
    %5 = arith.index_cast %4 : i32 to index
    %6 = vector.load %arg5[%c0, %5] : memref<48x128xf32, #tpu.memory_space<vmem>>, vector<48x128xf32>
    %c0_1 = arith.constant 0 : index
    %7 = arith.index_cast %4 : i32 to index
    %8 = vector.load %arg6[%c0_1, %7] : memref<1x128xf32, #tpu.memory_space<vmem>>, vector<1x128xf32>
    %c0_2 = arith.constant 0 : index
    %c0_3 = arith.constant 0 : index
    %9 = vector.load %arg9[%c0_2, %c0_3] : memref<16x48xf32, #tpu.memory_space<vmem>>, vector<16x48xf32>
    %cst = arith.constant dense<0.000000e+00> : vector<16x128xf32>
    %10 = tpu.matmul %9, %6, %cst {dimension_numbers = #tpu.dot_dimension_numbers<[1], [0], [0], [1], [0, 0, 1, 1], [], []>} : vector<16x48xf32>, vector<48x128xf32>, vector<16x128xf32> -> vector<16x128xf32>
    %11 = vector.broadcast %8 : vector<1x128xf32> to vector<16x128xf32>
    %12 = arith.addf %10, %11 : vector<16x128xf32>
    %c0_4 = arith.constant 0 : index
    %c0_5 = arith.constant 0 : index
    %13 = vector.load %arg8[%c0_4, %c0_5] : memref<16x128xf32, #tpu.memory_space<vmem>>, vector<16x128xf32>
    tpu.vector_store %arg8[%c0_4, %c0_5], %12 {strides = array<i32>} : memref<16x128xf32, #tpu.memory_space<vmem>>, vector<16x128xf32>,
    return
  }
  func.func @transform_0(%arg0: i32, %arg1: i32) -> (i32, i32) {
    %c0_i32 = arith.constant 0 : i32
    %c0_i32_0 = arith.constant 0 : i32
    return %arg0, %c0_i32 : i32, i32
  }
  func.func @transform_1(%arg0: i32, %arg1: i32) -> (i32, i32) {
    %c0_i32 = arith.constant 0 : i32
    %c0_i32_0 = arith.constant 0 : i32
    %c0_i32_1 = arith.constant 0 : i32
    return %c0_i32, %c0_i32_0 : i32, i32
  }
  func.func @transform_2(%arg0: i32, %arg1: i32) -> (i32, i32) {
    %c0_i32 = arith.constant 0 : i32
    %c0_i32_0 = arith.constant 0 : i32
    %c0_i32_1 = arith.constant 0 : i32
    return %c0_i32, %c0_i32_0 : i32, i32
  }
  func.func @transform_3(%arg0: i32, %arg1: i32) -> (i32, i32) {
    %c0_i32 = arith.constant 0 : i32
    %c0_i32_0 = arith.constant 0 : i32
    %c0_i32_1 = arith.constant 0 : i32
    return %c0_i32, %c0_i32_0 : i32, i32
  }
  func.func @transform_4(%arg0: i32, %arg1: i32) -> (i32, i32) {
    %c0_i32 = arith.constant 0 : i32
    %c0_i32_0 = arith.constant 0 : i32
    %c0_i32_1 = arith.constant 0 : i32
    return %c0_i32, %c0_i32_0 : i32, i32
  }
  func.func @transform_5(%arg0: i32, %arg1: i32) -> (i32, i32) {
    %c0_i32 = arith.constant 0 : i32
    %c0_i32_0 = arith.constant 0 : i32
    return %arg0, %c0_i32 : i32, i32
  }
  func.func @transform_6(%arg0: i32, %arg1: i32) -> (i32, i32) {
    %c0_i32 = arith.constant 0 : i32
    return %arg0, %arg1 : i32, i32
  }
}

</mosaic_0001>

<llo_original>
// kernel: tpu_custom_call.1
$region0: #{tpu_custom_call.1}
  #allocation0 [shape = 'u32[]', space=smem, size = 0x4, offset = 0x4, fixed_abs, tag = 'smem constant byte address 0x4 - core index']
  #allocation1 [shape = 'u32[72,128]{1,0:T(1,128)}', space=vmem, size = 0x9000, scoped, tag = 'internal scratch']
  #allocation2 [shape = 'f32[16,48]{1,0:T(8,128)}', space=vmem, size = 0x2000, scoped, tag = 'scratch operand']
  %s0 = inlined_call_operand.hbm [shape: f32[16,32], index: 0, kind: input, shape index: {}]
  %s1 = inlined_call_operand.hbm [shape: f32[32,48], index: 1, kind: input, shape index: {}]
  %s2 = inlined_call_operand.vmem [shape: f32[1,48], index: 2, kind: input, shape index: {}]
  %s3 = inlined_call_operand.hbm [shape: f32[48,128], index: 3, kind: input, shape index: {}]
  %s4 = inlined_call_operand.vmem [shape: f32[1,128], index: 4, kind: input, shape index: {}]
  %s5 = inlined_call_operand.hbm [shape: f32[16,48], index: 5, kind: output, shape index: {0}]
  %s6 = inlined_call_operand.hbm [shape: f32[16,64], index: 6, kind: output, shape index: {1}]
  %7 = xla_tuple %s5, %s6
  %s8 = sld [smem:[#allocation0]]
  $region54: #{tpu_custom_call.1} parent=0
    _
  %s10 = ssub.s32 1, %s8
  %s11 = scalar_select 0, %s10, %s8
  $region1: #{tpu_custom_call.1} parent=0
    #allocation3 [shape = 'u8[8192]{0}', space=vmem, size = 0x2000, scoped, tag = 'input window, operand 0, single buffered']
    #allocation4 [shape = 's32[1]{0}', space=sflag, size = 0x4, scoped, tag = 'scoped memory for tpu_custom_call.1']
    #allocation5 [shape = 's32[1]{0}', space=sflag, size = 0x4, scoped, tag = 'scoped memory for tpu_custom_call.1']
    #allocation6 [shape = 'u8[16384]{0}', space=vmem, size = 0x4000, scoped, tag = 'input window, operand 1, single buffered']
    #allocation7 [shape = 's32[1]{0}', space=sflag, size = 0x4, scoped, tag = 'scoped memory for tpu_custom_call.1']
    #allocation8 [shape = 'u8[24576]{0}', space=vmem, size = 0x6000, scoped, tag = 'input window, operand 3, single buffered']
    #allocation9 [shape = 'u8[8192]{0}', space=vmem, size = 0x2000, scoped, tag = 'output window, operand 0, single buffered']
    #allocation10 [shape = 'u8[8192]{0}', space=vmem, size = 0x2000, scoped, tag = 'output window, operand 1, single buffered']
    #allocation11 [shape = 's32[1]{0}', space=sflag, size = 0x4, scoped, tag = 'scoped memory for tpu_custom_call.1']
    %12 = vsyncpa [#allocation4], 0
    %13 = vsyncpa [#allocation7], 0
    %14 = vsyncpa [#allocation5], 0
    %15 = vsyncpa [#allocation11], 0
    // Predicated region
    $region2: #{tpu_custom_call.1} parent=1 // pred_check
      _
    $region3: #{tpu_custom_call.1} parent=1 // pred_check_branch
      %17 = sbr.rel (0) target = $region5
    $region4: #{tpu_custom_call.1} parent=1 // pred_region
      %19 = vsyncadd [#allocation4], 0
      %s20 = sshll.u32 %s0, 4
      %s21 = int_to_ptr.hbm [resolvable:$true] %s20
      %s22 = sshll.u32 [#allocation3], 4
      %s23 = int_to_ptr.vmem [resolvable:$true] %s22
      %28 = dma.hbm_to_vmem [thread:$0]  %s21, 256, %s23, [#allocation4], 128, 128, 8
    $region5: #{tpu_custom_call.1} parent=1 // pred_fallthru
      _
    // Predicated region
    $region6: #{tpu_custom_call.1} parent=1 // pred_check
      _
    $region7: #{tpu_custom_call.1} parent=1 // pred_check_branch
      %30 = sbr.rel (0) target = $region9
    $region8: #{tpu_custom_call.1} parent=1 // pred_region
      %32 = vsyncadd [#allocation7], 0
      %s33 = sshll.u32 %s1, 4
      %s34 = int_to_ptr.hbm [resolvable:$true] %s33
      %s35 = sshll.u32 [#allocation6], 4
      %s36 = int_to_ptr.vmem [resolvable:$true] %s35
      %41 = dma.hbm_to_vmem [thread:$0]  %s34, 512, %s36, [#allocation7], 128, 128, 8
    $region9: #{tpu_custom_call.1} parent=1 // pred_fallthru
      _
    // Predicated region
    $region10: #{tpu_custom_call.1} parent=1 // pred_check
      _
    $region11: #{tpu_custom_call.1} parent=1 // pred_check_branch
      %43 = sbr.rel (0) target = $region13
    $region12: #{tpu_custom_call.1} parent=1 // pred_region
      _
    $region13: #{tpu_custom_call.1} parent=1 // pred_fallthru
      _
    // Predicated region
    $region14: #{tpu_custom_call.1} parent=1 // pred_check
      _
    $region15: #{tpu_custom_call.1} parent=1 // pred_check_branch
      %45 = sbr.rel (0) target = $region17
    $region16: #{tpu_custom_call.1} parent=1 // pred_region
      %47 = vsyncadd [#allocation7], 0
      %s48 = sshll.u32 %s3, 4
      %s49 = int_to_ptr.hbm [resolvable:$true] %s48
      %s50 = sshll.u32 [#allocation8], 4
      %s51 = int_to_ptr.vmem [resolvable:$true] %s50
      %56 = dma.hbm_to_vmem [thread:$0]  %s49, 768, %s51, [#allocation7], 128, 128, 8
    $region17: #{tpu_custom_call.1} parent=1 // pred_fallthru
      _
    // Predicated region
    $region18: #{tpu_custom_call.1} parent=1 // pred_check
      _
    $region19: #{tpu_custom_call.1} parent=1 // pred_check_branch
      %58 = sbr.rel (0) target = $region21
    $region20: #{tpu_custom_call.1} parent=1 // pred_region
      _
    $region21: #{tpu_custom_call.1} parent=1 // pred_fallthru
      _
    // Predicated region
    $region22: #{tpu_custom_call.1} parent=1 // pred_check
      _
    $region23: #{tpu_custom_call.1} parent=1 // pred_check_branch
      %60 = sbr.rel (0) target = $region25
    $region24: #{tpu_custom_call.1} parent=1 // pred_region
      %62 = dma.done [#allocation4], 256
    $region25: #{tpu_custom_call.1} parent=1 // pred_fallthru
      _
    // Predicated region
    $region26: #{tpu_custom_call.1} parent=1 // pred_check
      _
    $region27: #{tpu_custom_call.1} parent=1 // pred_check_branch
      %64 = sbr.rel (0) target = $region29
    $region28: #{tpu_custom_call.1} parent=1 // pred_region
      %66 = dma.done [#allocation7], 512
    $region29: #{tpu_custom_call.1} parent=1 // pred_fallthru
      _
    // Predicated region
    $region30: #{tpu_custom_call.1} parent=1 // pred_check
      _
    $region31: #{tpu_custom_call.1} parent=1 // pred_check_branch
      %68 = sbr.rel (0) target = $region33
    $region32: #{tpu_custom_call.1} parent=1 // pred_region
      %70 = dma.done [#allocation7], 768
    $region33: #{tpu_custom_call.1} parent=1 // pred_fallthru
      _
    %p71 = scmp.eq.s32.totalorder 0, 0
    // Predicated region
    $region34: #{tpu_custom_call.1} parent=1 // pred_check
      %p72 = pneg %p71
    $region35: #{tpu_custom_call.1} parent=1 // pred_check_branch
      %74 = sbr.rel (%p72) target = $region37
    $region36: #{tpu_custom_call.1} parent=1 // pred_region
      %v75 = vld [vmem:[#allocation3] sm:$0xff]
      %v76 = vld [vmem:[#allocation3 + $0x8] sm:$0xff]
      %v77 = vld [vmem:[#allocation6] sm:$0xff]
      %v78 = vld [vmem:[#allocation6 + $0x8] sm:$0xff]
      %v79 = vld [vmem:[#allocation6 + $0x10] sm:$0xff]
      %v80 = vld [vmem:[#allocation6 + $0x18] sm:$0xff]
      %v81 = vld [vmem:[%s2] sm:$0x1]
      %v83 = vperm.slane %v81, 0
      %vm85 = vcmask 261120
      %v87 = vsel %vm85, %v75, 0
      %v90 = vsel %vm85, %v76, 0
      %92 = vmatpush.msra.mxu0 0.0
      %93 = vmatpush.msra.mxu0 0.0
      %94 = vmatpush.msra.mxu0 0.0
      %95 = vmatpush.msra.mxu0 0.0
      %96 = vmatpush.msra.mxu0 0.0
      %97 = vmatpush.msra.mxu0 0.0
      %98 = vmatpush.msra.mxu0 0.0
      %99 = vmatpush.msra.mxu0 0.0
      %100 = vmatpush.msra.mxu0 0.0
      %101 = vmatpush.msra.mxu0 0.0
      %102 = vmatpush.msra.mxu0 0.0
      %103 = vmatpush.msra.mxu0 0.0
      %104 = vmatpush.msra.mxu0 %v80
      %105 = vmatpush.msra.mxu0 %v79
      %106 = vmatpush.msra.mxu0 %v78
      %107 = vmatpush.msra.mxu0 %v77
      %108 = vmatmul.f32.gmra.mxu0 %v87
      %v109 = vpop.f32.mrf.mxu0
      %v110 = vadd.f32 %v83, %v109
      %111 = vmatmul.f32.gmra.mxu0 %v90
      %v112 = vpop.f32.mrf.mxu0
      %v113 = vadd.f32 %v83, %v112
      %114 = vdwg.mxu0
      %vm115 = vcmask 392192
      %116 = vst.msk [vmem:[#allocation9] sm:$0xff] %vm115, %v110
      %117 = vst.msk [vmem:[#allocation9 + $0x8] sm:$0xff] %vm115, %v113
      %118 = vst.msk [vmem:[#allocation2] sm:$0xff] %vm115, %v110
      %119 = vst.msk [vmem:[#allocation2 + $0x8] sm:$0xff] %vm115, %v113
    $region37: #{tpu_custom_call.1} parent=1 // pred_fallthru
      _
    %s120 = smul.u32 0, 128
    %s121 = sshra.s32 %s120, 7
    %s122 = sand.u32 %s120, 127
    %s123 = scalar_lea.vmem [#allocation8], %s121
    %v124 = vld [vmem:[%s123] sm:$0xff]
    %v125 = vld [vmem:[%s123 + $0x8] sm:$0xff]
    %v126 = vld [vmem:[%s123 + $0x10] sm:$0xff]
    %v127 = vld [vmem:[%s123 + $0x18] sm:$0xff]
    %v128 = vld [vmem:[%s123 + $0x20] sm:$0xff]
    %v129 = vld [vmem:[%s123 + $0x28] sm:$0xff]
    %s130 = scalar_lea.vmem %s4, %s121
    %v131 = vld [vmem:[%s130] sm:$0x1]
    %v132 = vld [vmem:[#allocation2] sm:$0xff]
    %v133 = vld [vmem:[#allocation2 + $0x8] sm:$0xff]
    %v135 = vperm.slane %v131, 0
    %vm137 = vcmask 392192
    %v139 = vsel %vm137, %v132, 0
    %v142 = vsel %vm137, %v133, 0
    %144 = vmatpush.msra.mxu0 0.0
    %145 = vmatpush.msra.mxu0 0.0
    %146 = vmatpush.msra.mxu0 0.0
    %147 = vmatpush.msra.mxu0 0.0
    %148 = vmatpush.msra.mxu0 0.0
    %149 = vmatpush.msra.mxu0 0.0
    %150 = vmatpush.msra.mxu0 0.0
    %151 = vmatpush.msra.mxu0 0.0
    %152 = vmatpush.msra.mxu0 0.0
    %153 = vmatpush.msra.mxu0 0.0
    %154 = vmatpush.msra.mxu0 %v129
    %155 = vmatpush.msra.mxu0 %v128
    %156 = vmatpush.msra.mxu0 %v127
    %157 = vmatpush.msra.mxu0 %v126
    %158 = vmatpush.msra.mxu0 %v125
    %159 = vmatpush.msra.mxu0 %v124
    %160 = vmatmul.f32.gmra.mxu0 %v139
    %v161 = vpop.f32.mrf.mxu0
    %v162 = vadd.f32 %v135, %v161
    %163 = vmatmul.f32.gmra.mxu0 %v142
    %v164 = vpop.f32.mrf.mxu0
    %v165 = vadd.f32 %v135, %v164
    %166 = vdwg.mxu0
    %167 = vst [vmem:[#allocation10] sm:$0xff] %v162
    %168 = vst [vmem:[#allocation10 + $0x8] sm:$0xff] %v165
    // Predicated region
    $region38: #{tpu_custom_call.1} parent=1 // pred_check
      _
    $region39: #{tpu_custom_call.1} parent=1 // pred_check_branch
      %170 = sbr.rel (0) target = $region41
    $region40: #{tpu_custom_call.1} parent=1 // pred_region
      %172 = vsyncadd [#allocation5], 0
      %s173 = sshll.u32 [#allocation9], 4
      %s174 = int_to_ptr.vmem [resolvable:$true] %s173
      %s175 = sshll.u32 %s5, 4
      %s176 = int_to_ptr.hbm [resolvable:$true] %s175
      %181 = dma.vmem_to_hbm [thread:$0]  %s174, 256, %s176, [#allocation5], 128, 128, 8
    $region41: #{tpu_custom_call.1} parent=1 // pred_fallthru
      _
    // Predicated region
    $region42: #{tpu_custom_call.1} parent=1 // pred_check
      _
    $region43: #{tpu_custom_call.1} parent=1 // pred_check_branch
      %183 = sbr.rel (0) target = $region45
    $region44: #{tpu_custom_call.1} parent=1 // pred_region
      %185 = vsyncadd [#allocation11], 0
      %s186 = sshll.u32 [#allocation10], 4
      %s187 = int_to_ptr.vmem [resolvable:$true] %s186
      %s188 = sshll.u32 %s6, 4
      %s189 = int_to_ptr.hbm [resolvable:$true] %s188
      %194 = dma.vmem_to_hbm [thread:$0]  %s187, 256, %s189, [#allocation11], 128, 128, 8
    $region45: #{tpu_custom_call.1} parent=1 // pred_fallthru
      _
    // Predicated region
    $region46: #{tpu_custom_call.1} parent=1 // pred_check
      _
    $region47: #{tpu_custom_call.1} parent=1 // pred_check_branch
      %196 = sbr.rel (0) target = $region49
    $region48: #{tpu_custom_call.1} parent=1 // pred_region
      %198 = dma.done [#allocation5], 256
    $region49: #{tpu_custom_call.1} parent=1 // pred_fallthru
      _
    // Predicated region
    $region50: #{tpu_custom_call.1} parent=1 // pred_check
      _
    $region51: #{tpu_custom_call.1} parent=1 // pred_check_branch
      %200 = sbr.rel (0) target = $region53
    $region52: #{tpu_custom_call.1} parent=1 // pred_region
      %202 = dma.done [#allocation11], 256
    $region53: #{tpu_custom_call.1} parent=1 // pred_fallthru
      _
    %203 = vsyncpa [#allocation4], 1
    %204 = vsyncpa [#allocation7], 1
    %205 = vsyncpa [#allocation5], 1
    %206 = vsyncpa [#allocation11], 1

</llo_original>
